<compile_context>
chip_gen: v6e
topology: v6e:2x2x1
jax: 0.10.0
libtpu: 0.0.40
codegen_flags: <defaults>
</compile_context>

<pallas_src>
import jax
import jax.numpy as jnp
from jax.experimental import pallas as pl
from jax.experimental.pallas import tpu as pltpu


def _hbm_identity_copy_kernel(a_hbm_ref, o_hbm_ref, copy_sem):
    # forward() returns the parameter unchanged: one direct HBM->HBM DMA.
    cp = pltpu.make_async_copy(a_hbm_ref, o_hbm_ref, copy_sem)
    cp.start()
    cp.wait()


def vector_var_forward(A: jax.Array) -> jax.Array:
    """Pallas implementation of vector_var.forward(): returns the parameter A.

    A has shape (set_channels, size, size).  The whole tensor is moved in a
    single grid-less invocation via one HBM->HBM DMA (no per-channel grid,
    no VMEM staging).
    """
    return pl.pallas_call(
        _hbm_identity_copy_kernel,
        out_shape=jax.ShapeDtypeStruct(A.shape, A.dtype),
        in_specs=[pl.BlockSpec(memory_space=pl.ANY)],
        out_specs=pl.BlockSpec(memory_space=pl.ANY),
        scratch_shapes=[pltpu.SemaphoreType.DMA(())],
    )(A)


def make_vector_var_params(key, set_channels: int, size: int, dtype=jnp.float32):
    """Deterministic stand-in for torch.rand(set_channels, size, size)."""
    # TODO(synk): jax.random.uniform is not bit-identical to torch.rand; this
    # only reproduces the init distribution, which is all forward() needs.
    return jax.random.uniform(key, (set_channels, size, size), dtype=dtype)


if __name__ == "__main__":
    # Small deterministic setup consistent with the module's __init__:
    #   c.set_channels -> 4, size -> 16
    set_channels = 4
    size = 16

    key = jax.random.PRNGKey(0)
    A = make_vector_var_params(key, set_channels, size)

    out = vector_var_forward(A)
    out = jax.block_until_ready(out)

    # Correctness: forward() must return the parameter exactly.
    assert out.shape == (set_channels, size, size), out.shape
    assert out.dtype == A.dtype, out.dtype
    assert bool(jnp.array_equal(out, A)), "kernel output does not match parameter"

    print("KERNEL_OK")
</pallas_src>

<mosaic_0001>
module attributes {stable_mosaic.version = 11 : i64} {
  func.func @_hbm_identity_copy_kernel(%arg0: memref<4x16x16xf32, #tpu.memory_space<any>>, %arg1: memref<4x16x16xf32, #tpu.memory_space<any>>, %arg2: memref<!tpu.dma_semaphore, #tpu.memory_space<semaphore_mem>>) attributes {dimension_semantics = [], scalar_prefetch = 0 : i64, scratch_operands = 1 : i64, tpu.core_type = #tpu.core_type<tc>} {
    tpu.enqueue_dma source(%arg0 : memref<4x16x16xf32, #tpu.memory_space<any>>) target(%arg1 : memref<4x16x16xf32, #tpu.memory_space<any>>) target_semaphore(%arg2 : memref<!tpu.dma_semaphore, #tpu.memory_space<semaphore_mem>>)
    tpu.wait_dma2 semaphore(%arg2 : memref<!tpu.dma_semaphore, #tpu.memory_space<semaphore_mem>>) src(%arg0 : memref<4x16x16xf32, #tpu.memory_space<any>>) dst(%arg1 : memref<4x16x16xf32, #tpu.memory_space<any>>)
    return
  }
}

</mosaic_0001>

<llo_original>
// kernel: tpu_custom_call.1
$region0: #{tpu_custom_call.1}
  #allocation0 [shape = 'u32[]', space=smem, size = 0x4, offset = 0x4, fixed_abs, tag = 'smem constant byte address 0x4 - core index']
  #allocation1 [shape = 'u32[144,128]{1,0:T(1,128)}', space=vmem, size = 0x12000, scoped, tag = 'internal scratch']
  #allocation2 [shape = 's32[1]{0}', space=sflag, size = 0x4, scoped, tag = 'scratch operand']
  #allocation3 [shape = 's32[]', space=sflag, size = 0x4, offset = 0, fixed_abs, tag = 'sflag constant byte address 0x0 - dummy sync flag']
  #allocation4 [shape = 'u32[0]{0}', space=smem, size = 0, offset = 0, fixed_abs, tag = 'smem constant byte address 0x0 - null']
  %s0 = inlined_call_operand.hbm [shape: f32[4,16,16], index: 0, kind: input, shape index: {}]
  %s1 = inlined_call_operand.hbm [shape: f32[4,16,16], index: 1, kind: output, shape index: {}]
  %s2 = sld [smem:[#allocation0]]
  $region2: #{tpu_custom_call.1} parent=0
    _
  %s4 = ssub.s32 1, %s2
  %s5 = scalar_select 0, %s4, %s2
  %s7 = sshll.u32 1, 14
  %s8 = sxor.u32 4294967295, %s7
  %12 = dma.general %s0, 1024, %s1, [#allocation2], 131072, [#allocation4], 0, 0
  %s13 = smul.u32 4, 16
  %s14 = smul.u32 %s13, 1
  %s15 = sshll.u32 %s14, 4
  %16 = dma.done [#allocation2], %s15
  %17 = vsyncmov [#allocation2]
  %s18 = vpop.sfrf %17
  %p19 = scmp.eq.s32.totalorder %s18, 0
  %p20 = pneg %p19
  %22 = shalt.err (%p20)

</llo_original>
